<compile_context>
chip_gen: v7x
topology: tpu7x:2x2x1
jax: 0.10.0
libtpu: 0.0.40
codegen_flags: <defaults>
</compile_context>

<pallas_src>
import jax
import jax.numpy as jnp
from jax.experimental import pallas as pl
from jax.experimental.pallas import tpu as pltpu

_LANE = 128            # TPU vreg lane width (last dim)
_SUBLANE = 8           # TPU vreg sublane count (second-to-last dim, f32)
_MAX_BLOCK_ROWS = 4096  # 4096 x 128 = 512K elements -> ~2 MiB f32 per block


def constant_kernel(param_ref, out_ref):
    # param_ref: SMEM scalar parameter, shape (1, 1), f32
    # out_ref:   VMEM output block, shape (block_rows, 128) — sublane+lane dense
    val = param_ref[0, 0].astype(out_ref.dtype)
    out_ref[...] = jnp.broadcast_to(val, out_ref.shape)


def constant_layer_forward(x, output_param):
    """x: (B, C, H, W) array. Only x.shape[0] is used (at trace time); x is
    deliberately NOT passed to pallas_call so the unused NCHW tensor is never
    DMA'd.  output_param: shape (1,) learnable parameter.
    Returns: (B, 1) array (dtype of output_param), every row = output_param[0]."""
    B = x.shape[0]
    out_dtype = output_param.dtype

    # Robustness guard: empty batch (would otherwise divide by zero at trace time).
    if B == 0:
        return jnp.zeros((0, 1), dtype=out_dtype)

    # 2-D sublane+lane dense layout: write (rows_pad, 128), rows_pad padded only
    # up to the 8x128 vreg tile.  Block rows capped so one block is ~2 MiB f32;
    # for essentially all realistic B this means a single grid step.  A ragged
    # last block (rows_pad not a multiple of block_rows, only at huge B) is
    # handled by Pallas' boundary masking rather than padding the whole output.
    rows = pl.cdiv(B, _LANE)
    rows_pad = pl.cdiv(rows, _SUBLANE) * _SUBLANE
    block_rows = min(_MAX_BLOCK_ROWS, rows_pad)
    grid = (pl.cdiv(rows_pad, block_rows),)

    # SMEM scalar table wants 2-D; carry the scalar as f32 (lossless for
    # f32/bf16/f16 params), cast to the output dtype inside the kernel so bf16
    # outputs are stored natively.
    param_2d = output_param.reshape(1, 1).astype(jnp.float32)

    out_2d = pl.pallas_call(
        constant_kernel,
        out_shape=jax.ShapeDtypeStruct((rows_pad, _LANE), out_dtype),
        grid=grid,
        in_specs=[pl.BlockSpec(memory_space=pltpu.SMEM)],
        # (block_rows, 128): both trailing dims (8,128)-aligned -> full unmasked
        # vst of dense vregs, ~8x fewer store bundles than a (1, N) strip.
        out_specs=pl.BlockSpec((block_rows, _LANE), lambda i: (i, 0)),
        compiler_params=pltpu.CompilerParams(
            dimension_semantics=("parallel",)),
    )(param_2d)

    # Free layout plumbing back to the PyTorch output shape (B, 1).
    return out_2d.reshape(-1)[:B].reshape(B, 1)


if __name__ == "__main__":
    key = jax.random.PRNGKey(0)

    # Deterministic parameter init, matching ConstantLayer(output_value=1.0)
    output_param = jnp.array([1.0], dtype=jnp.float32)

    # Small NCHW input consistent with a conv-style pipeline
    x = jax.random.normal(key, (2, 4, 16, 16), dtype=jnp.float32)

    y = constant_layer_forward(x, output_param)
    y = jax.block_until_ready(y)

    # Reference check: expand of the scalar parameter to (B, 1)
    y_ref = jnp.broadcast_to(output_param.reshape(1, 1), (x.shape[0], 1))
    assert y.shape == (x.shape[0], 1), y.shape
    assert y.dtype == output_param.dtype, y.dtype
    assert jnp.allclose(y, y_ref), (y, y_ref)

    print("KERNEL_OK")
</pallas_src>

<mosaic_0001>
module attributes {stable_mosaic.version = 11 : i64} {
  func.func @constant_kernel(%arg0: i32, %arg1: memref<1x1xf32, #tpu.memory_space<smem>>, %arg2: memref<8x128xf32, #tpu.memory_space<vmem>>) attributes {dimension_semantics = [#tpu.dimension_semantics<parallel>], iteration_bounds = array<i64: 1>, scalar_prefetch = 0 : i64, scratch_operands = 0 : i64, tpu.core_type = #tpu.core_type<tc>, window_params = [{transform_indices = @transform_0, window_bounds = array<i64: 1, 1>}, {transform_indices = @transform_1, window_bounds = array<i64: 8, 128>}]} {
    %c0 = arith.constant 0 : index
    %c0_0 = arith.constant 0 : index
    %0 = memref.load %arg1[%c0, %c0_0] : memref<1x1xf32, #tpu.memory_space<smem>>
    %1 = vector.broadcast %0 : f32 to vector<8x128xf32>
    %c0_1 = arith.constant 0 : index
    %c0_2 = arith.constant 0 : index
    %2 = vector.load %arg2[%c0_1, %c0_2] : memref<8x128xf32, #tpu.memory_space<vmem>>, vector<8x128xf32>
    tpu.vector_store %arg2[%c0_1, %c0_2], %1 {strides = array<i32>} : memref<8x128xf32, #tpu.memory_space<vmem>>, vector<8x128xf32>,
    return
  }
  func.func @transform_0(%arg0: i32) -> (i32, i32) {
    %c0_i32 = arith.constant 0 : i32
    %c0_i32_0 = arith.constant 0 : i32
    %c0_i32_1 = arith.constant 0 : i32
    return %c0_i32, %c0_i32_0 : i32, i32
  }
  func.func @transform_1(%arg0: i32) -> (i32, i32) {
    %c0_i32 = arith.constant 0 : i32
    %c0_i32_0 = arith.constant 0 : i32
    return %arg0, %c0_i32 : i32, i32
  }
}

</mosaic_0001>

<llo_original>
// kernel: tpu_custom_call.1
$region0: #{tpu_custom_call.1}
  #allocation0 [shape = 'u32[]', space=smem, size = 0x4, offset = 0x4, fixed_abs, tag = 'smem constant byte address 0x4 - core index']
  #allocation1 [shape = 'u32[144,128]{1,0:T(1,128)}', space=vmem, size = 0x12000, scoped, tag = 'internal scratch']
  #allocation2 [shape = 'f32[1,1]{1,0:T(1,128)S(6)}', space=smem, size = 0x200, scoped, tag = 'scoped memory for tpu_custom_call.1']
  %s0 = inlined_call_operand.<no memory space> [shape: f32[1,1], index: 0, kind: input, shape index: {}]
  %s1 = inlined_call_operand.hbm [shape: f32[8,128], index: 1, kind: output, shape index: {}]
  %s2 = sld [smem:[#allocation0]]
  $region14: #{tpu_custom_call.1} parent=0
    _
  %s4 = ssub.s32 1, %s2
  %s5 = scalar_select 0, %s4, %s2
  %6 = sst [smem:[#allocation2]] %s0
  $region1: #{tpu_custom_call.1} parent=0
    #allocation3 [shape = 'u8[4096]{0}', space=vmem, size = 0x1000, scoped, tag = 'output window, operand 0, single buffered']
    #allocation4 [shape = 's32[1]{0}', space=sflag, size = 0x4, scoped, tag = 'scoped memory for tpu_custom_call.1']
    %7 = vsyncpa [#allocation4], 0
    // Predicated region
    $region2: #{tpu_custom_call.1} parent=1 // pred_check
      _
    $region3: #{tpu_custom_call.1} parent=1 // pred_check_branch
      %9 = sbr.rel (0) target = $region5
    $region4: #{tpu_custom_call.1} parent=1 // pred_region
      _
    $region5: #{tpu_custom_call.1} parent=1 // pred_fallthru
      _
    %s10 = sld [smem:[#allocation2]]
    %v11 = vstv %s10
    %12 = vst [vmem:[#allocation3] sm:$0xff] %v11
    // Predicated region
    $region6: #{tpu_custom_call.1} parent=1 // pred_check
      _
    $region7: #{tpu_custom_call.1} parent=1 // pred_check_branch
      %14 = sbr.rel (0) target = $region9
    $region8: #{tpu_custom_call.1} parent=1 // pred_region
      %s16 = ssub.s32 128, 128
      %17 = vsyncadd [#allocation4], %s16
      %s19 = sshll.u32 [#allocation3], 4
      %s20 = int_to_ptr.vmem [resolvable:$true] %s19
      %22 = dma.vmem_to_hbm [thread:$0]  %s20, 128, %s1, [#allocation4]
    $region9: #{tpu_custom_call.1} parent=1 // pred_fallthru
      _
    // Predicated region
    $region10: #{tpu_custom_call.1} parent=1 // pred_check
      _
    $region11: #{tpu_custom_call.1} parent=1 // pred_check_branch
      %24 = sbr.rel (0) target = $region13
    $region12: #{tpu_custom_call.1} parent=1 // pred_region
      %25 = dma.done [#allocation4], 128
    $region13: #{tpu_custom_call.1} parent=1 // pred_fallthru
      _
    %26 = vsyncpa [#allocation4], 1

</llo_original>
